<compile_context>
chip_gen: v5e
topology: v5e:2x2
jax: 0.10.0
libtpu: 0.0.40
codegen_flags: <defaults>
</compile_context>

<pallas_src>
import jax
import jax.numpy as jnp
from jax.experimental import pallas as pl
from jax.experimental.pallas import tpu as pltpu

# --- tuning knobs (sweep per generation; defaults are safe everywhere) -------
_SMALL_COPY_BYTES = 2 << 20          # <= 2 MiB: latency-bound -> single DMA.
_TARGET_CHUNK_BYTES = 128 << 20      # aim ~128 MiB per DMA for big copies.
_MAX_DMA_CHUNKS_PER_CORE = 4         # sweep 1/2/4/8; one DMA already hits roofline.


def _num_tensorcores() -> int:
    """Best-effort TensorCore count (2 on v7x, 1 on v5e/v6e). Falls back to 1."""
    try:
        info = pltpu.get_tpu_info()
        for attr in ("num_cores", "tensorcores_per_chip", "num_tensorcores",
                     "cores_per_chip", "core_count"):
            n = getattr(info, attr, None)
            if isinstance(n, int) and n >= 1:
                return n
    except Exception:
        pass
    return 1


def _cost_estimate(nbytes: int) -> pl.CostEstimate:
    # Pure memory op: read nbytes + write nbytes, no flops.
    return pl.CostEstimate(flops=0, transcendentals=0,
                           bytes_accessed=int(2 * nbytes))


def _balanced_bounds(dim0: int, num_chunks: int):
    """Static, byte-balanced (start, size) splits of a leading axis."""
    num_chunks = max(1, min(num_chunks, dim0))
    base, rem = divmod(dim0, num_chunks)
    bounds, start = [], 0
    for i in range(num_chunks):
        size = base + (1 if i < rem else 0)
        if size:
            bounds.append((start, size))
            start += size
    return bounds


# --- kernels ------------------------------------------------------------------
def _whole_copy_kernel(x_hbm, o_hbm, sem):
    # Single whole-array HBM->HBM DMA (small / 0-d / leading-dim-1 inputs).
    cp = pltpu.make_async_copy(x_hbm, o_hbm, sem)
    cp.start()
    cp.wait()


def _make_chunked_copy_kernel(bounds):
    """Copy x -> o with one big HBM->HBM DMA per static leading-axis chunk.

    All chunk copies are started first (concurrently in flight on separate
    semaphores), then waited on.
    """
    def kernel(x_hbm, o_hbm, sems):
        copies = []
        for idx, (start, size) in enumerate(bounds):   # static Python loop
            cp = pltpu.make_async_copy(
                x_hbm.at[pl.ds(start, size)],
                o_hbm.at[pl.ds(start, size)],
                sems.at[idx],
            )
            cp.start()
            copies.append(cp)
        for cp in copies:
            cp.wait()
    return kernel


def _make_core_parallel_kernel(rows_per_core, core_bounds):
    """v7x path: each TensorCore DMAs its own contiguous slab of rows.

    `core_bounds` are static (offset, size) chunks *within* a core's slab;
    the slab origin is program_id(0) * rows_per_core (dynamic start, static
    sizes -> legal pl.ds slicing of the HBM refs).
    """
    def kernel(x_hbm, o_hbm, sems):
        core_start = pl.program_id(0) * rows_per_core
        copies = []
        for idx, (off, size) in enumerate(core_bounds):  # static Python loop
            cp = pltpu.make_async_copy(
                x_hbm.at[pl.ds(core_start + off, size)],
                o_hbm.at[pl.ds(core_start + off, size)],
                sems.at[idx],
            )
            cp.start()
            copies.append(cp)
        for cp in copies:
            cp.wait()
    return kernel


# --- wrapper -------------------------------------------------------------------
def pytorch_wrapper_forward(x, *, copy=True,
                            small_copy_bytes=_SMALL_COPY_BYTES,
                            target_chunk_bytes=_TARGET_CHUNK_BYTES,
                            max_chunks_per_core=_MAX_DMA_CHUNKS_PER_CORE,
                            **kwargs):
    """Pallas implementation of PytorchWrapper(Transform()).forward(x) == x.

    copy=False returns x unchanged (zero HBM traffic, identical to the PyTorch
    module's semantics).  copy=True materializes a fresh buffer via large
    HBM->HBM DMAs so callers may keep mutating / donating x independently.
    """
    x = jnp.asarray(x)

    # Zero-copy fast path: identity really is "return the same tensor".
    if not copy:
        return x

    # Zero-element edge case: nothing to DMA; return a fresh empty buffer.
    if x.size == 0:
        return jnp.zeros(x.shape, x.dtype)

    nbytes = int(x.size) * int(x.dtype.itemsize)
    cost = _cost_estimate(nbytes)
    common = dict(
        out_shape=jax.ShapeDtypeStruct(x.shape, x.dtype),
        in_specs=[pl.BlockSpec(memory_space=pl.ANY)],
        out_specs=pl.BlockSpec(memory_space=pl.ANY),
        cost_estimate=cost,
    )

    # Small / unsplittable tensors: one descriptor, one semaphore.
    if x.ndim == 0 or x.shape[0] <= 1 or nbytes <= small_copy_bytes:
        return pl.pallas_call(
            _whole_copy_kernel,
            scratch_shapes=[pltpu.SemaphoreType.DMA(())],
            **common,
        )(x)

    dim0 = x.shape[0]
    bytes_per_row = nbytes // dim0
    ncores = _num_tensorcores()

    # --- v7x: shard the byte range across both TensorCores -------------------
    if ncores >= 2 and dim0 % ncores == 0:
        rows_per_core = dim0 // ncores
        per_core_bytes = rows_per_core * bytes_per_row
        n_chunks = min(max_chunks_per_core,
                       max(1, -(-per_core_bytes // max(1, target_chunk_bytes))))
        core_bounds = _balanced_bounds(rows_per_core, n_chunks)
        kernel = _make_core_parallel_kernel(rows_per_core, core_bounds)
        return pl.pallas_call(
            kernel,
            grid=(ncores,),
            scratch_shapes=[pltpu.SemaphoreType.DMA((len(core_bounds),))],
            compiler_params=pltpu.CompilerParams(
                dimension_semantics=(pltpu.CORE_PARALLEL,)),
            **common,
        )(x)

    # --- single-core: byte-balanced chunked copy ------------------------------
    n_chunks = min(max_chunks_per_core,
                   max(1, -(-nbytes // max(1, target_chunk_bytes))))
    bounds = _balanced_bounds(dim0, n_chunks)
    if len(bounds) <= 1:
        return pl.pallas_call(
            _whole_copy_kernel,
            scratch_shapes=[pltpu.SemaphoreType.DMA(())],
            **common,
        )(x)

    kernel = _make_chunked_copy_kernel(bounds)
    return pl.pallas_call(
        kernel,
        scratch_shapes=[pltpu.SemaphoreType.DMA((len(bounds),))],
        **common,
    )(x)


if __name__ == "__main__":
    key = jax.random.PRNGKey(0)

    # 1) Small NCHW f32 input -> small-tensor fast path (single DMA).
    x = jax.random.normal(key, (2, 4, 16, 16), dtype=jnp.float32)
    y = jax.block_until_ready(pytorch_wrapper_forward(x))
    assert y.shape == x.shape and y.dtype == x.dtype
    assert jnp.array_equal(y, x), "identity pass-through mismatch (f32 NCHW)"

    # 2) Ragged, non-(8,128)-friendly bf16 shape: DMA path needs no padding.
    x2 = jax.random.normal(key, (3, 5, 7), dtype=jnp.bfloat16)
    y2 = jax.block_until_ready(pytorch_wrapper_forward(x2))
    assert y2.shape == x2.shape and y2.dtype == x2.dtype
    assert jnp.array_equal(y2, x2), "identity pass-through mismatch (bf16 ragged)"

    # 3) Force the chunked multi-DMA path at small size (compile coverage of
    #    the large-copy code path on any chip).
    x3 = jax.random.normal(key, (8, 32, 32), dtype=jnp.float32)
    y3 = jax.block_until_ready(pytorch_wrapper_forward(
        x3, small_copy_bytes=0, target_chunk_bytes=1024))
    assert y3.shape == x3.shape and y3.dtype == x3.dtype
    assert jnp.array_equal(y3, x3), "identity pass-through mismatch (chunked path)"

    # 4) Zero-copy path (matches the PyTorch module exactly: same values, no copy).
    y4 = pytorch_wrapper_forward(x, copy=False)
    assert y4.shape == x.shape and y4.dtype == x.dtype
    assert jnp.array_equal(y4, x), "identity pass-through mismatch (zero-copy)"

    # 5) Zero-element edge case: no kernel launched, no zero-length DMA.
    x5 = jnp.zeros((0, 4, 16, 16), jnp.float32)
    y5 = jax.block_until_ready(pytorch_wrapper_forward(x5))
    assert y5.shape == x5.shape and y5.dtype == x5.dtype

    print("KERNEL_OK")
</pallas_src>

<mosaic_0001>
module attributes {stable_mosaic.version = 11 : i64} {
  func.func @_whole_copy_kernel(%arg0: memref<2x4x16x16xf32, #tpu.memory_space<any>>, %arg1: memref<2x4x16x16xf32, #tpu.memory_space<any>>, %arg2: memref<!tpu.dma_semaphore, #tpu.memory_space<semaphore_mem>>) attributes {dimension_semantics = [], scalar_prefetch = 0 : i64, scratch_operands = 1 : i64, tpu.core_type = #tpu.core_type<tc>} {
    tpu.enqueue_dma source(%arg0 : memref<2x4x16x16xf32, #tpu.memory_space<any>>) target(%arg1 : memref<2x4x16x16xf32, #tpu.memory_space<any>>) target_semaphore(%arg2 : memref<!tpu.dma_semaphore, #tpu.memory_space<semaphore_mem>>)
    tpu.wait_dma2 semaphore(%arg2 : memref<!tpu.dma_semaphore, #tpu.memory_space<semaphore_mem>>) src(%arg0 : memref<2x4x16x16xf32, #tpu.memory_space<any>>) dst(%arg1 : memref<2x4x16x16xf32, #tpu.memory_space<any>>)
    return
  }
}

</mosaic_0001>

<llo_original>
// kernel: tpu_custom_call.1
$region0: #{tpu_custom_call.1}
  #allocation0 [shape = 'u32[]', space=smem, size = 0x4, offset = 0x4, fixed_abs, tag = 'smem constant byte address 0x4 - core index']
  #allocation1 [shape = 'u32[72,128]{1,0:T(1,128)}', space=vmem, size = 0x9000, scoped, tag = 'internal scratch']
  #allocation2 [shape = 's32[1]{0}', space=sflag, size = 0x4, scoped, tag = 'scratch operand']
  #allocation3 [shape = 's32[]', space=sflag, size = 0x4, offset = 0, fixed_abs, tag = 'sflag constant byte address 0x0 - dummy sync flag']
  #allocation4 [shape = 'u32[0]{0}', space=smem, size = 0, offset = 0, fixed_abs, tag = 'smem constant byte address 0x0 - null']
  %s0 = inlined_call_operand.hbm [shape: f32[2,4,16,16], index: 0, kind: input, shape index: {}]
  %s1 = inlined_call_operand.hbm [shape: f32[2,4,16,16], index: 1, kind: output, shape index: {}]
  %s2 = sld [smem:[#allocation0]]
  $region2: #{tpu_custom_call.1} parent=0
    _
  %s4 = ssub.s32 1, %s2
  %s5 = scalar_select 0, %s4, %s2
  %s7 = sshll.u32 1, 14
  %s8 = sxor.u32 4294967295, %s7
  %s10 = sshll.u32 %s0, 4
  %s11 = int_to_ptr.hbm [resolvable:$true] %s10
  %s12 = sshll.u32 %s1, 4
  %s13 = int_to_ptr.hbm [resolvable:$true] %s12
  %16 = dma.general %s11, 2048, %s13, [#allocation2], [#allocation3], [#allocation4], 0, 0
  %s17 = smul.u32 2, 4
  %s18 = smul.u32 %s17, 16
  %s19 = smul.u32 %s18, 1
  %s20 = sshll.u32 %s19, 4
  %21 = dma.done [#allocation2], %s20
  %22 = vsyncmov [#allocation2]
  %s23 = vpop.sfrf %22
  %p24 = scmp.eq.s32.totalorder %s23, 0
  %p25 = pneg %p24
  %27 = shalt.err (%p25)

</llo_original>
